<compile_context>
chip_gen: v5e
topology: v5e:2x2
jax: 0.10.0
libtpu: 0.0.40
codegen_flags: <defaults>
</compile_context>

<pallas_src>
import jax
import jax.numpy as jnp
from jax.experimental import pallas as pl
from jax.experimental.pallas import tpu as pltpu

IN_FEATURES = 138
LAYER_DIMS = [(IN_FEATURES, 64), (64, 32), (32, 16), (16, 1)]


def _round_up(n, m):
    return -(-n // m) * m


def mlp_kernel(x_ref, w1_ref, b1_ref, w2_ref, b2_ref, w3_ref, b3_ref,
               w4_ref, b4_ref, o_ref):
    """One batch tile of the MLP.

    Batch-major dataflow: x tile is (TB, 138) f32 straight from HBM, every
    layer is h @ W with W in (in, out) layout, f32 accumulation on the MXU,
    bf16 activations between layers. Compute is negligible here — the kernel
    is paced by the x-tile DMA — so narrow-N matmuls are fine.
    """
    cdt = w1_ref.dtype
    x = x_ref[...].astype(cdt)                                 # (TB, 138) bf16

    # fc1 + ReLU
    h = jnp.dot(x, w1_ref[...], preferred_element_type=jnp.float32) + b1_ref[...]
    h = jnp.maximum(h, 0.0).astype(cdt)                        # (TB, 64)

    # fc2 + ReLU
    h = jnp.dot(h, w2_ref[...], preferred_element_type=jnp.float32) + b2_ref[...]
    h = jnp.maximum(h, 0.0).astype(cdt)                        # (TB, 32)

    # fc3 + ReLU
    h = jnp.dot(h, w3_ref[...], preferred_element_type=jnp.float32) + b3_ref[...]
    h = jnp.maximum(h, 0.0).astype(cdt)                        # (TB, 16)

    # output + sigmoid (exp and approx reciprocal both run on the EUP slot)
    logits = jnp.dot(h, w4_ref[...], preferred_element_type=jnp.float32) + b4_ref[...]
    o_ref[...] = pl.reciprocal(1.0 + jnp.exp(-logits), approx=True).astype(o_ref.dtype)


def pack_params(params, compute_dtype=jnp.bfloat16):
    """PyTorch-style (out,in)/(out,) f32 params -> kernel layout.

    Weights transposed once to (in, out) and cast to bf16 so the kernel does
    plain h @ W dots; biases kept f32 as (1, out) rows so they broadcast over
    the batch (sublane) axis of the f32 accumulator.
    """
    packed = {}
    for i in range(1, 5):
        packed[f"w{i}"] = params[f"w{i}"].astype(compute_dtype).T   # (in, out)
        packed[f"b{i}"] = params[f"b{i}"].astype(jnp.float32)[None, :]  # (1, out)
    return packed


def chess_ai_forward(x, packed, *, tb=2048):
    """x: (B, 138) float32. packed: pack_params(...) output. Returns (B, 1) f32."""
    B = x.shape[0]

    # Batch tile: sublane multiple of 8, capped at `tb`.
    tb_eff = min(tb, _round_up(B, 8))
    b_pad = _round_up(B, tb_eff)
    if b_pad != B:
        # Only pays a copy when B isn't tile-aligned; zero rows are dropped on
        # the way out.
        x = jnp.pad(x, ((0, b_pad - B), (0, 0)))
    grid = (b_pad // tb_eff,)

    # Constant index_map -> each weight/bias is DMA'd once and stays resident.
    resident = lambda a: pl.BlockSpec(a.shape, lambda i: (0, 0))

    out = pl.pallas_call(
        mlp_kernel,
        out_shape=jax.ShapeDtypeStruct((b_pad, 1), jnp.float32),
        grid=grid,
        in_specs=[
            pl.BlockSpec((tb_eff, IN_FEATURES), lambda i: (i, 0)),   # x tile
            resident(packed["w1"]), resident(packed["b1"]),
            resident(packed["w2"]), resident(packed["b2"]),
            resident(packed["w3"]), resident(packed["b3"]),
            resident(packed["w4"]), resident(packed["b4"]),
        ],
        out_specs=pl.BlockSpec((tb_eff, 1), lambda i: (i, 0)),
        compiler_params=pltpu.CompilerParams(
            dimension_semantics=("parallel",),
            vmem_limit_bytes=32 * 1024 * 1024),
    )(x, packed["w1"], packed["b1"], packed["w2"], packed["b2"],
      packed["w3"], packed["b3"], packed["w4"], packed["b4"])

    return out[:B]


def init_params(key):
    """PyTorch nn.Linear-style init: weight (out, in), bias (out,)."""
    params = {}
    for i, (fan_in, fan_out) in enumerate(LAYER_DIMS, start=1):
        key, kw, kb = jax.random.split(key, 3)
        bound = 1.0 / float(fan_in) ** 0.5
        params[f"w{i}"] = jax.random.uniform(
            kw, (fan_out, fan_in), jnp.float32, -bound, bound)
        params[f"b{i}"] = jax.random.uniform(
            kb, (fan_out,), jnp.float32, -bound, bound)
    return params


def ref_forward(x, params, compute_dtype=jnp.bfloat16):
    """Plain-JAX reference using the same bf16 weights / f32 accumulation."""
    h = x.astype(compute_dtype)
    for i in range(1, 5):
        w = params[f"w{i}"].astype(compute_dtype)
        h = jnp.dot(h, w.T, preferred_element_type=jnp.float32) + params[f"b{i}"]
        if i < 4:
            h = jnp.maximum(h, 0.0).astype(compute_dtype)
    return jax.nn.sigmoid(h)


if __name__ == "__main__":
    key = jax.random.PRNGKey(0)
    key, kx = jax.random.split(key)

    B = 8
    x = jax.random.normal(kx, (B, IN_FEATURES), jnp.float32)
    params = init_params(key)
    packed = pack_params(params)

    out = chess_ai_forward(x, packed)
    jax.block_until_ready(out)

    expected = ref_forward(x, params)
    assert out.shape == (B, 1)
    assert jnp.allclose(out, expected, atol=1e-3, rtol=1e-3), (
        float(jnp.max(jnp.abs(out - expected))))

    print("KERNEL_OK")
</pallas_src>

<mosaic_0001>
module attributes {stable_mosaic.version = 11 : i64} {
  func.func @mlp_kernel(%arg0: i32, %arg1: memref<8x138xf32, #tpu.memory_space<vmem>>, %arg2: memref<138x64xbf16, #tpu.memory_space<vmem>>, %arg3: memref<1x64xf32, #tpu.memory_space<vmem>>, %arg4: memref<64x32xbf16, #tpu.memory_space<vmem>>, %arg5: memref<1x32xf32, #tpu.memory_space<vmem>>, %arg6: memref<32x16xbf16, #tpu.memory_space<vmem>>, %arg7: memref<1x16xf32, #tpu.memory_space<vmem>>, %arg8: memref<16x1xbf16, #tpu.memory_space<vmem>>, %arg9: memref<1x1xf32, #tpu.memory_space<vmem>>, %arg10: memref<8x1xf32, #tpu.memory_space<vmem>>) attributes {dimension_semantics = [#tpu.dimension_semantics<parallel>], iteration_bounds = array<i64: 1>, scalar_prefetch = 0 : i64, scratch_operands = 0 : i64, tpu.core_type = #tpu.core_type<tc>, window_params = [{transform_indices = @transform_0, window_bounds = array<i64: 8, 138>}, {pipeline_mode = #tpu.pipeline_mode<synchronous>, transform_indices = @transform_1, window_bounds = array<i64: 138, 64>}, {pipeline_mode = #tpu.pipeline_mode<synchronous>, transform_indices = @transform_2, window_bounds = array<i64: 1, 64>}, {pipeline_mode = #tpu.pipeline_mode<synchronous>, transform_indices = @transform_3, window_bounds = array<i64: 64, 32>}, {pipeline_mode = #tpu.pipeline_mode<synchronous>, transform_indices = @transform_4, window_bounds = array<i64: 1, 32>}, {pipeline_mode = #tpu.pipeline_mode<synchronous>, transform_indices = @transform_5, window_bounds = array<i64: 32, 16>}, {pipeline_mode = #tpu.pipeline_mode<synchronous>, transform_indices = @transform_6, window_bounds = array<i64: 1, 16>}, {pipeline_mode = #tpu.pipeline_mode<synchronous>, transform_indices = @transform_7, window_bounds = array<i64: 16, 1>}, {pipeline_mode = #tpu.pipeline_mode<synchronous>, transform_indices = @transform_8, window_bounds = array<i64: 1, 1>}, {transform_indices = @transform_9, window_bounds = array<i64: 8, 1>}]} {
    %c0 = arith.constant 0 : index
    %c0_0 = arith.constant 0 : index
    %0 = vector.load %arg1[%c0, %c0_0] : memref<8x138xf32, #tpu.memory_space<vmem>>, vector<8x138xf32>
    %1 = arith.truncf %0 : vector<8x138xf32> to vector<8x138xbf16>
    %c0_1 = arith.constant 0 : index
    %c0_2 = arith.constant 0 : index
    %2 = vector.load %arg2[%c0_1, %c0_2] : memref<138x64xbf16, #tpu.memory_space<vmem>>, vector<138x64xbf16>
    %cst = arith.constant dense<0.000000e+00> : vector<8x64xf32>
    %3 = tpu.matmul %1, %2, %cst {dimension_numbers = #tpu.dot_dimension_numbers<[1], [0], [0], [1], [0, 0, 1, 1], [], []>} : vector<8x138xbf16>, vector<138x64xbf16>, vector<8x64xf32> -> vector<8x64xf32>
    %c0_3 = arith.constant 0 : index
    %c0_4 = arith.constant 0 : index
    %4 = vector.load %arg3[%c0_3, %c0_4] : memref<1x64xf32, #tpu.memory_space<vmem>>, vector<1x64xf32>
    %5 = vector.broadcast %4 : vector<1x64xf32> to vector<8x64xf32>
    %6 = arith.addf %3, %5 : vector<8x64xf32>
    %cst_5 = arith.constant 0.000000e+00 : f32
    %7 = vector.broadcast %cst_5 : f32 to vector<8x64xf32>
    %8 = arith.maximumf %6, %7 : vector<8x64xf32>
    %9 = arith.truncf %8 : vector<8x64xf32> to vector<8x64xbf16>
    %c0_6 = arith.constant 0 : index
    %c0_7 = arith.constant 0 : index
    %10 = vector.load %arg4[%c0_6, %c0_7] : memref<64x32xbf16, #tpu.memory_space<vmem>>, vector<64x32xbf16>
    %cst_8 = arith.constant dense<0.000000e+00> : vector<8x32xf32>
    %11 = tpu.matmul %9, %10, %cst_8 {dimension_numbers = #tpu.dot_dimension_numbers<[1], [0], [0], [1], [0, 0, 1, 1], [], []>} : vector<8x64xbf16>, vector<64x32xbf16>, vector<8x32xf32> -> vector<8x32xf32>
    %c0_9 = arith.constant 0 : index
    %c0_10 = arith.constant 0 : index
    %12 = vector.load %arg5[%c0_9, %c0_10] : memref<1x32xf32, #tpu.memory_space<vmem>>, vector<1x32xf32>
    %13 = vector.broadcast %12 : vector<1x32xf32> to vector<8x32xf32>
    %14 = arith.addf %11, %13 : vector<8x32xf32>
    %cst_11 = arith.constant 0.000000e+00 : f32
    %15 = vector.broadcast %cst_11 : f32 to vector<8x32xf32>
    %16 = arith.maximumf %14, %15 : vector<8x32xf32>
    %17 = arith.truncf %16 : vector<8x32xf32> to vector<8x32xbf16>
    %c0_12 = arith.constant 0 : index
    %c0_13 = arith.constant 0 : index
    %18 = vector.load %arg6[%c0_12, %c0_13] : memref<32x16xbf16, #tpu.memory_space<vmem>>, vector<32x16xbf16>
    %cst_14 = arith.constant dense<0.000000e+00> : vector<8x16xf32>
    %19 = tpu.matmul %17, %18, %cst_14 {dimension_numbers = #tpu.dot_dimension_numbers<[1], [0], [0], [1], [0, 0, 1, 1], [], []>} : vector<8x32xbf16>, vector<32x16xbf16>, vector<8x16xf32> -> vector<8x16xf32>
    %c0_15 = arith.constant 0 : index
    %c0_16 = arith.constant 0 : index
    %20 = vector.load %arg7[%c0_15, %c0_16] : memref<1x16xf32, #tpu.memory_space<vmem>>, vector<1x16xf32>
    %21 = vector.broadcast %20 : vector<1x16xf32> to vector<8x16xf32>
    %22 = arith.addf %19, %21 : vector<8x16xf32>
    %cst_17 = arith.constant 0.000000e+00 : f32
    %23 = vector.broadcast %cst_17 : f32 to vector<8x16xf32>
    %24 = arith.maximumf %22, %23 : vector<8x16xf32>
    %25 = arith.truncf %24 : vector<8x16xf32> to vector<8x16xbf16>
    %c0_18 = arith.constant 0 : index
    %c0_19 = arith.constant 0 : index
    %26 = vector.load %arg8[%c0_18, %c0_19] : memref<16x1xbf16, #tpu.memory_space<vmem>>, vector<16x1xbf16>
    %cst_20 = arith.constant dense<0.000000e+00> : vector<8x1xf32>
    %27 = tpu.matmul %25, %26, %cst_20 {dimension_numbers = #tpu.dot_dimension_numbers<[1], [0], [0], [1], [0, 0, 1, 1], [], []>} : vector<8x16xbf16>, vector<16x1xbf16>, vector<8x1xf32> -> vector<8x1xf32>
    %c0_21 = arith.constant 0 : index
    %c0_22 = arith.constant 0 : index
    %28 = vector.load %arg9[%c0_21, %c0_22] : memref<1x1xf32, #tpu.memory_space<vmem>>, vector<1x1xf32>
    %29 = vector.broadcast %28 : vector<1x1xf32> to vector<8x1xf32>
    %30 = arith.addf %27, %29 : vector<8x1xf32>
    %cst_23 = arith.constant 0.000000e+00 : f32
    %31 = vector.broadcast %cst_23 : f32 to vector<8x1xf32>
    %32 = arith.subf %31, %30 : vector<8x1xf32>
    %33 = math.exp %32 : vector<8x1xf32>
    %cst_24 = arith.constant 1.000000e+00 : f32
    %34 = vector.broadcast %cst_24 : f32 to vector<8x1xf32>
    %35 = arith.addf %34, %33 : vector<8x1xf32>
    %36 = tpu.reciprocal %35 {approx = true} : vector<8x1xf32> -> vector<8x1xf32>
    %c0_25 = arith.constant 0 : index
    %c0_26 = arith.constant 0 : index
    %37 = vector.load %arg10[%c0_25, %c0_26] : memref<8x1xf32, #tpu.memory_space<vmem>>, vector<8x1xf32>
    tpu.vector_store %arg10[%c0_25, %c0_26], %36 {strides = array<i32>} : memref<8x1xf32, #tpu.memory_space<vmem>>, vector<8x1xf32>,
    return
  }
  func.func @transform_0(%arg0: i32) -> (i32, i32) {
    %c0_i32 = arith.constant 0 : i32
    %c0_i32_0 = arith.constant 0 : i32
    return %arg0, %c0_i32 : i32, i32
  }
  func.func @transform_1(%arg0: i32) -> (i32, i32) {
    %c0_i32 = arith.constant 0 : i32
    %c0_i32_0 = arith.constant 0 : i32
    %c0_i32_1 = arith.constant 0 : i32
    return %c0_i32, %c0_i32_0 : i32, i32
  }
  func.func @transform_2(%arg0: i32) -> (i32, i32) {
    %c0_i32 = arith.constant 0 : i32
    %c0_i32_0 = arith.constant 0 : i32
    %c0_i32_1 = arith.constant 0 : i32
    return %c0_i32, %c0_i32_0 : i32, i32
  }
  func.func @transform_3(%arg0: i32) -> (i32, i32) {
    %c0_i32 = arith.constant 0 : i32
    %c0_i32_0 = arith.constant 0 : i32
    %c0_i32_1 = arith.constant 0 : i32
    return %c0_i32, %c0_i32_0 : i32, i32
  }
  func.func @transform_4(%arg0: i32) -> (i32, i32) {
    %c0_i32 = arith.constant 0 : i32
    %c0_i32_0 = arith.constant 0 : i32
    %c0_i32_1 = arith.constant 0 : i32
    return %c0_i32, %c0_i32_0 : i32, i32
  }
  func.func @transform_5(%arg0: i32) -> (i32, i32) {
    %c0_i32 = arith.constant 0 : i32
    %c0_i32_0 = arith.constant 0 : i32
    %c0_i32_1 = arith.constant 0 : i32
    return %c0_i32, %c0_i32_0 : i32, i32
  }
  func.func @transform_6(%arg0: i32) -> (i32, i32) {
    %c0_i32 = arith.constant 0 : i32
    %c0_i32_0 = arith.constant 0 : i32
    %c0_i32_1 = arith.constant 0 : i32
    return %c0_i32, %c0_i32_0 : i32, i32
  }
  func.func @transform_7(%arg0: i32) -> (i32, i32) {
    %c0_i32 = arith.constant 0 : i32
    %c0_i32_0 = arith.constant 0 : i32
    %c0_i32_1 = arith.constant 0 : i32
    return %c0_i32, %c0_i32_0 : i32, i32
  }
  func.func @transform_8(%arg0: i32) -> (i32, i32) {
    %c0_i32 = arith.constant 0 : i32
    %c0_i32_0 = arith.constant 0 : i32
    %c0_i32_1 = arith.constant 0 : i32
    return %c0_i32, %c0_i32_0 : i32, i32
  }
  func.func @transform_9(%arg0: i32) -> (i32, i32) {
    %c0_i32 = arith.constant 0 : i32
    %c0_i32_0 = arith.constant 0 : i32
    return %arg0, %c0_i32 : i32, i32
  }
}

</mosaic_0001>

<llo_original>
// kernel: tpu_custom_call.1
$region0: #{tpu_custom_call.1}
  #allocation0 [shape = 'u32[]', space=smem, size = 0x4, offset = 0x4, fixed_abs, tag = 'smem constant byte address 0x4 - core index']
  #allocation1 [shape = 'u32[72,128]{1,0:T(1,128)}', space=vmem, size = 0x9000, scoped, tag = 'internal scratch']
  #allocation2 [shape = 'f32[1,1]{1,0:T(1,128)S(1)}', space=vmem, size = 0x200, scoped, tag = 'scoped memory for tpu_custom_call.1']
  %s0 = inlined_call_operand.vmem [shape: f32[8,138], index: 0, kind: input, shape index: {}]
  %s1 = inlined_call_operand.vmem [shape: bf16[138,64], index: 1, kind: input, shape index: {}]
  %s2 = inlined_call_operand.vmem [shape: f32[1,64], index: 2, kind: input, shape index: {}]
  %s3 = inlined_call_operand.vmem [shape: bf16[64,32], index: 3, kind: input, shape index: {}]
  %s4 = inlined_call_operand.vmem [shape: f32[1,32], index: 4, kind: input, shape index: {}]
  %s5 = inlined_call_operand.vmem [shape: bf16[32,16], index: 5, kind: input, shape index: {}]
  %s6 = inlined_call_operand.vmem [shape: f32[1,16], index: 6, kind: input, shape index: {}]
  %s7 = inlined_call_operand.vmem [shape: bf16[16,1], index: 7, kind: input, shape index: {}]
  %s8 = inlined_call_operand.<no memory space> [shape: f32[1,1], index: 8, kind: input, shape index: {}]
  %s9 = inlined_call_operand.vmem [shape: f32[8,1], index: 9, kind: output, shape index: {}]
  %s10 = sld [smem:[#allocation0]]
  $region46: #{tpu_custom_call.1} parent=0
    _
  %s12 = ssub.s32 1, %s10
  %s13 = scalar_select 0, %s12, %s10
  %v14 = vstv %s8
  %15 = vst [vmem:[#allocation2] sm:$0x1] %v14
  // Predicated region
  $region2: #{tpu_custom_call.1} parent=0 // pred_check
    _
  $region3: #{tpu_custom_call.1} parent=0 // pred_check_branch
    %17 = sbr.rel (0) target = $region5
  $region4: #{tpu_custom_call.1} parent=0 // pred_region
    _
  $region5: #{tpu_custom_call.1} parent=0 // pred_fallthru
    _
  // Predicated region
  $region6: #{tpu_custom_call.1} parent=0 // pred_check
    _
  $region7: #{tpu_custom_call.1} parent=0 // pred_check_branch
    %19 = sbr.rel (0) target = $region9
  $region8: #{tpu_custom_call.1} parent=0 // pred_region
    _
  $region9: #{tpu_custom_call.1} parent=0 // pred_fallthru
    _
  // Predicated region
  $region10: #{tpu_custom_call.1} parent=0 // pred_check
    _
  $region11: #{tpu_custom_call.1} parent=0 // pred_check_branch
    %21 = sbr.rel (0) target = $region13
  $region12: #{tpu_custom_call.1} parent=0 // pred_region
    _
  $region13: #{tpu_custom_call.1} parent=0 // pred_fallthru
    _
  // Predicated region
  $region14: #{tpu_custom_call.1} parent=0 // pred_check
    _
  $region15: #{tpu_custom_call.1} parent=0 // pred_check_branch
    %23 = sbr.rel (0) target = $region17
  $region16: #{tpu_custom_call.1} parent=0 // pred_region
    _
  $region17: #{tpu_custom_call.1} parent=0 // pred_fallthru
    _
  // Predicated region
  $region18: #{tpu_custom_call.1} parent=0 // pred_check
    _
  $region19: #{tpu_custom_call.1} parent=0 // pred_check_branch
    %25 = sbr.rel (0) target = $region21
  $region20: #{tpu_custom_call.1} parent=0 // pred_region
    _
  $region21: #{tpu_custom_call.1} parent=0 // pred_fallthru
    _
  // Predicated region
  $region22: #{tpu_custom_call.1} parent=0 // pred_check
    _
  $region23: #{tpu_custom_call.1} parent=0 // pred_check_branch
    %27 = sbr.rel (0) target = $region25
  $region24: #{tpu_custom_call.1} parent=0 // pred_region
    _
  $region25: #{tpu_custom_call.1} parent=0 // pred_fallthru
    _
  // Predicated region
  $region26: #{tpu_custom_call.1} parent=0 // pred_check
    _
  $region27: #{tpu_custom_call.1} parent=0 // pred_check_branch
    %29 = sbr.rel (0) target = $region29
  $region28: #{tpu_custom_call.1} parent=0 // pred_region
    _
  $region29: #{tpu_custom_call.1} parent=0 // pred_fallthru
    _
  // Predicated region
  $region30: #{tpu_custom_call.1} parent=0 // pred_check
    _
  $region31: #{tpu_custom_call.1} parent=0 // pred_check_branch
    %31 = sbr.rel (0) target = $region33
  $region32: #{tpu_custom_call.1} parent=0 // pred_region
    _
  $region33: #{tpu_custom_call.1} parent=0 // pred_fallthru
    _
  // Predicated region
  $region34: #{tpu_custom_call.1} parent=0 // pred_check
    _
  $region35: #{tpu_custom_call.1} parent=0 // pred_check_branch
    %33 = sbr.rel (0) target = $region37
  $region36: #{tpu_custom_call.1} parent=0 // pred_region
    _
  $region37: #{tpu_custom_call.1} parent=0 // pred_fallthru
    _
  %v35 = vld [vmem:[%s0] sm:$0xff]
  %v36 = vld [vmem:[%s0 + $0x8] sm:$0xff]
  %v37 = vpack.c.bf16 %v35, %v35
  %v38 = vpack.c.bf16 %v36, %v36
  %v39 = vld [vmem:[%s1] sm:$0xf]
  %v40 = vld [vmem:[%s1 + $0x4] sm:$0xf]
  %v41 = vld [vmem:[%s1 + $0x8] sm:$0xf]
  %v42 = vld [vmem:[%s1 + $0xc] sm:$0xf]
  %v43 = vld [vmem:[%s1 + $0x10] sm:$0xf]
  %v44 = vld [vmem:[%s1 + $0x14] sm:$0xf]
  %v45 = vld [vmem:[%s1 + $0x18] sm:$0xf]
  %v46 = vld [vmem:[%s1 + $0x1c] sm:$0xf]
  %v47 = vld [vmem:[%s1 + $0x20] sm:$0xf]
  %v48 = vld [vmem:[%s1 + $0x24] sm:$0xf]
  %v49 = vld [vmem:[%s1 + $0x28] sm:$0xf]
  %v50 = vld [vmem:[%s1 + $0x2c] sm:$0xf]
  %v51 = vld [vmem:[%s1 + $0x30] sm:$0xf]
  %v52 = vld [vmem:[%s1 + $0x34] sm:$0xf]
  %v53 = vld [vmem:[%s1 + $0x38] sm:$0xf]
  %v54 = vld [vmem:[%s1 + $0x3c] sm:$0xf]
  %v55 = vld [vmem:[%s1 + $0x40] sm:$0xf]
  %v56 = vld [vmem:[%s1 + $0x44] sm:$0x1]
  %v57 = vld [vmem:[%s2] sm:$0x1]
  %v59 = vperm.slane %v57, 0
  %v79 = vunpack.c.l.b16 %v39
  %v80 = vunpack.c.l.b16 %v40
  %v81 = vunpack.c.l.b16 %v41
  %v82 = vunpack.c.l.b16 %v42
  %v83 = vunpack.c.l.b16 %v43
  %v84 = vunpack.c.l.b16 %v44
  %v85 = vunpack.c.l.b16 %v45
  %v86 = vunpack.c.l.b16 %v46
  %v87 = vunpack.c.l.b16 %v47
  %v88 = vunpack.c.l.b16 %v48
  %v89 = vunpack.c.l.b16 %v49
  %v90 = vunpack.c.l.b16 %v50
  %v91 = vunpack.c.l.b16 %v51
  %v92 = vunpack.c.l.b16 %v52
  %v93 = vunpack.c.l.b16 %v53
  %v94 = vunpack.c.l.b16 %v54
  %v95 = vunpack.c.l.b16 %v55
  %v96 = vunpack.c.l.b16 %v56
  %v97 = vpack.c.b16 %v80, %v79
  %v98 = vpack.c.b16 %v82, %v81
  %v99 = vpack.c.b16 %v84, %v83
  %v100 = vpack.c.b16 %v86, %v85
  %v101 = vpack.c.b16 %v88, %v87
  %v102 = vpack.c.b16 %v90, %v89
  %v103 = vpack.c.b16 %v92, %v91
  %v104 = vpack.c.b16 %v94, %v93
  %v105 = vpack.c.b16 %v96, %v95
  %vm114 = vcmask 80896
  %v116 = vsel %vm114, %v38, 0
  %vm118 = vcmask 1044480
  %v120 = vsel %vm118, %v105, 0
  %122 = vmatpush.bf16.msra.mxu0 %v104
  %123 = vmatpush.bf16.msra.mxu0 %v103
  %124 = vmatpush.bf16.msra.mxu0 %v102
  %125 = vmatpush.bf16.msra.mxu0 %v101
  %126 = vmatpush.bf16.msra.mxu0 %v100
  %127 = vmatpush.bf16.msra.mxu0 %v99
  %128 = vmatpush.bf16.msra.mxu0 %v98
  %129 = vmatpush.bf16.msra.mxu0 %v97
  %130 = vmatmul.bf16.gmra.mxu0 %v37
  %v131 = vpop.f32.mrf.mxu0
  %v132 = vadd.f32 %v59, %v131
  %v133 = vpop.f32.mrf.mxu0
  %134 = vdwg.mxu0
  %135 = vmatpush.bf16.msra.mxu0 0
  %136 = vmatpush.bf16.msra.mxu0 0
  %137 = vmatpush.bf16.msra.mxu0 0
  %138 = vmatpush.bf16.msra.mxu0 0
  %139 = vmatpush.bf16.msra.mxu0 0
  %140 = vmatpush.bf16.msra.mxu0 0
  %141 = vmatpush.bf16.msra.mxu0 0
  %142 = vmatpush.bf16.msra.mxu0 %v120
  %143 = vmatmul.bf16.gmra.mxu0 %v116
  %v144 = vpop.f32.mrf.mxu0
  %v145 = vadd.f32 %v132, %v144
  %v146 = vpop.f32.mrf.mxu0
  %147 = vdwg.mxu0
  %v148 = vmax.f32 %v145, 0.0
  %v149 = vpack.c.bf16 %v148, %v148
  %v150 = vld [vmem:[%s3] sm:$0xf]
  %v151 = vld [vmem:[%s3 + $0x4] sm:$0xf]
  %v152 = vld [vmem:[%s3 + $0x8] sm:$0xf]
  %v153 = vld [vmem:[%s3 + $0xc] sm:$0xf]
  %v154 = vld [vmem:[%s3 + $0x10] sm:$0xf]
  %v155 = vld [vmem:[%s3 + $0x14] sm:$0xf]
  %v156 = vld [vmem:[%s3 + $0x18] sm:$0xf]
  %v157 = vld [vmem:[%s3 + $0x1c] sm:$0xf]
  %v158 = vld [vmem:[%s4] sm:$0x1]
  %v160 = vperm.slane %v158, 0
  %v170 = vunpack.c.l.b16 %v150
  %v171 = vunpack.c.l.b16 %v151
  %v172 = vunpack.c.l.b16 %v152
  %v173 = vunpack.c.l.b16 %v153
  %v174 = vunpack.c.l.b16 %v154
  %v175 = vunpack.c.l.b16 %v155
  %v176 = vunpack.c.l.b16 %v156
  %v177 = vunpack.c.l.b16 %v157
  %v178 = vpack.c.b16 %v171, %v170
  %v179 = vpack.c.b16 %v173, %v172
  %v180 = vpack.c.b16 %v175, %v174
  %v181 = vpack.c.b16 %v177, %v176
  %vm186 = vcmask 523264
  %v188 = vsel %vm186, %v149, 0
  %190 = vmatpush.bf16.msra.mxu0 0
  %191 = vmatpush.bf16.msra.mxu0 0
  %192 = vmatpush.bf16.msra.mxu0 0
  %193 = vmatpush.bf16.msra.mxu0 0
  %194 = vmatpush.bf16.msra.mxu0 %v181
  %195 = vmatpush.bf16.msra.mxu0 %v180
  %196 = vmatpush.bf16.msra.mxu0 %v179
  %197 = vmatpush.bf16.msra.mxu0 %v178
  %198 = vmatmul.bf16.gmra.mxu0 %v188
  %v199 = vpop.f32.mrf.mxu0
  %v200 = vadd.f32 %v160, %v199
  %v201 = vpop.f32.mrf.mxu0
  %202 = vdwg.mxu0
  %v203 = vmax.f32 %v200, 0.0
  %v204 = vpack.c.bf16 %v203, %v203
  %v205 = vld [vmem:[%s5] sm:$0xf]
  %v206 = vld [vmem:[%s5 + $0x4] sm:$0xf]
  %v207 = vld [vmem:[%s5 + $0x8] sm:$0xf]
  %v208 = vld [vmem:[%s5 + $0xc] sm:$0xf]
  %v209 = vld [vmem:[%s6] sm:$0x1]
  %v211 = vperm.slane %v209, 0
  %v217 = vunpack.c.l.b16 %v205
  %v218 = vunpack.c.l.b16 %v206
  %v219 = vunpack.c.l.b16 %v207
  %v220 = vunpack.c.l.b16 %v208
  %v221 = vpack.c.b16 %v218, %v217
  %v222 = vpack.c.b16 %v220, %v219
  %vm225 = vcmask 261120
  %v227 = vsel %vm225, %v204, 0
  %229 = vmatpush.bf16.msra.mxu0 0
  %230 = vmatpush.bf16.msra.mxu0 0
  %231 = vmatpush.bf16.msra.mxu0 0
  %232 = vmatpush.bf16.msra.mxu0 0
  %233 = vmatpush.bf16.msra.mxu0 0
  %234 = vmatpush.bf16.msra.mxu0 0
  %235 = vmatpush.bf16.msra.mxu0 %v222
  %236 = vmatpush.bf16.msra.mxu0 %v221
  %237 = vmatmul.bf16.gmra.mxu0 %v227
  %v238 = vpop.f32.mrf.mxu0
  %v239 = vadd.f32 %v211, %v238
  %v240 = vpop.f32.mrf.mxu0
  %241 = vdwg.mxu0
  %v242 = vmax.f32 %v239, 0.0
  %v243 = vpack.c.bf16 %v242, %v242
  %v244 = vld [vmem:[%s7] sm:$0xf]
  %v245 = vld [vmem:[%s7 + $0x4] sm:$0xf]
  %v246 = vld [vmem:[#allocation2] sm:$0x1]
  %v248 = vperm.slane %v246, 0
  %v252 = vunpack.c.l.b16 %v244
  %v253 = vunpack.c.l.b16 %v245
  %v254 = vpack.c.b16 %v253, %v252
  %vm256 = vcmask 130048
  %v258 = vsel %vm256, %v243, 0
  %260 = vmatpush.bf16.msra.mxu0 0
  %261 = vmatpush.bf16.msra.mxu0 0
  %262 = vmatpush.bf16.msra.mxu0 0
  %263 = vmatpush.bf16.msra.mxu0 0
  %264 = vmatpush.bf16.msra.mxu0 0
  %265 = vmatpush.bf16.msra.mxu0 0
  %266 = vmatpush.bf16.msra.mxu0 0
  %267 = vmatpush.bf16.msra.mxu0 %v254
  %268 = vmatmul.bf16.gmra.mxu0 %v258
  %v269 = vpop.f32.mrf.mxu0
  %v270 = vadd.f32 %v248, %v269
  %v271 = vpop.f32.mrf.mxu0
  %272 = vdwg.mxu0
  %v273 = vsub.f32 0.0, %v270
  %v274 = vmul.f32 %v273, 1.442695
  %v275 = vpow.pop %v274
  %v276 = vadd.f32 %v275, 1.0
  %v277 = vrcp.pop %v276
  %vm278 = vcmask 7168
  %279 = vst.msk [vmem:[%s9] sm:$0xff] %vm278, %v277
  // Predicated region
  $region38: #{tpu_custom_call.1} parent=0 // pred_check
    _
  $region39: #{tpu_custom_call.1} parent=0 // pred_check_branch
    %281 = sbr.rel (0) target = $region41
  $region40: #{tpu_custom_call.1} parent=0 // pred_region
    _
  $region41: #{tpu_custom_call.1} parent=0 // pred_fallthru
    _
  // Predicated region
  $region42: #{tpu_custom_call.1} parent=0 // pred_check
    _
  $region43: #{tpu_custom_call.1} parent=0 // pred_check_branch
    %283 = sbr.rel (0) target = $region45
  $region44: #{tpu_custom_call.1} parent=0 // pred_region
    _
  $region45: #{tpu_custom_call.1} parent=0 // pred_fallthru
    _

</llo_original>
